<compile_context>
chip_gen: v7x
topology: tpu7x:2x2x1
jax: 0.10.0
libtpu: 0.0.40
codegen_flags: <defaults>
</compile_context>

<pallas_src>
import functools
import math

import jax
import jax.numpy as jnp
from jax.experimental import pallas as pl
from jax.experimental.pallas import tpu as pltpu


def _round_up(a: int, b: int) -> int:
    return ((a + b - 1) // b) * b


def _cdiv(a: int, b: int) -> int:
    return (a + b - 1) // b


def _sublane_multiple(dtype) -> int:
    """Second-to-last-dim tiling multiple by dtype packing (8 f32, 16 bf16, 32 int8/fp8)."""
    itemsize = jnp.dtype(dtype).itemsize
    return 8 * max(1, 4 // itemsize)


def _chip_budget(itemsize: int, override_elems):
    """(input-block element budget, scoped VMEM limit, is_small_vmem) for this chip."""
    try:
        vmem_cap = pltpu.get_tpu_info().vmem_capacity_bytes
    except Exception:  # CPU / interpret / older API — be conservative.
        vmem_cap = 64 * 1024 * 1024
    if vmem_cap >= 100 * 1024 * 1024:            # v5e / v6e: 128 MiB physical VMEM
        blk_bytes, vmem_limit, small = 16 * 1024 * 1024, 64 * 1024 * 1024, False
    else:                                        # v7x: 64 MiB per TensorCore
        blk_bytes, vmem_limit, small = 8 * 1024 * 1024, 48 * 1024 * 1024, True
    elems = max(1, blk_bytes // itemsize)
    if override_elems is not None:               # test hook: force multi-tile paths at small sizes
        elems = int(override_elems)
    return elems, vmem_limit, small


# --------------------------------------------------------------------------- kernels


def _mean_oneshot_kernel(x_ref, o_ref, *, inv_r, reduce_axis, keepdims):
    # Whole reduced axis fits in one tile: no accumulator round-trip.
    xf = x_ref[...].astype(jnp.float32)
    s = jnp.sum(xf, axis=reduce_axis, keepdims=keepdims)
    o_ref[...] = (s * inv_r).astype(o_ref.dtype)


def _mean_acc_kernel(x_ref, o_ref, acc_ref, *, inv_r, reduce_axis, keepdims,
                     r_total, tr, mask_needed, r_grid_axis):
    r = pl.program_id(r_grid_axis)

    @pl.when(r == 0)
    def _():
        acc_ref[...] = jnp.zeros_like(acc_ref)

    xf = x_ref[...].astype(jnp.float32)
    if mask_needed:
        # Only the last R tile is ragged; the compare/select is cheap VALU work in a
        # memory-bound kernel, so mask unconditionally (no branch).
        valid = r_total - r * tr
        ids = jax.lax.broadcasted_iota(jnp.int32, xf.shape, reduce_axis)
        xf = jnp.where(ids < valid, xf, 0.0)
    acc_ref[...] += jnp.sum(xf, axis=reduce_axis, keepdims=keepdims)

    @pl.when(r == pl.num_programs(r_grid_axis) - 1)
    def _():
        o_ref[...] = (acc_ref[...] * inv_r).astype(o_ref.dtype)


# --------------------------------------------------------------------- pallas drivers


def _mean_reduce_mid(x3, pre, r_total, post, sub, elem_budget, vmem_limit, is_small_vmem,
                     inv_r):
    """Mean over the middle axis of a (pre, R, post) view. Returns (pre, post)."""
    # --- tile selection: keep trailing (contiguous) dims big, shrink rows last -------
    min_tr = r_total if r_total <= sub else sub
    tpost = post
    if min_tr * tpost > elem_budget and post > 128:
        tpost = max(128, (elem_budget // min_tr) // 128 * 128)
        if tpost >= post:
            tpost = post

    if r_total * tpost <= elem_budget:
        tr = r_total                              # full reduced axis (any size is legal)
    else:
        tr = max(sub, (elem_budget // tpost) // sub * sub)
        tr = min(tr, r_total)

    tp_raw = max(1, elem_budget // (tr * tpost))
    if tp_raw >= pre or pre <= sub:
        tp = pre                                  # full dim: always a legal output block
    else:
        tp = max(sub, (tp_raw // sub) * sub)      # output block needs sub-aligned rows

    # Ensure >= 2 blocks on the parallel axes (keeps both v7x TensorCores busy).
    if _cdiv(pre, tp) * _cdiv(post, tpost) < 2:
        if pre > sub:
            tp = _round_up(_cdiv(pre, 2), sub)
        elif is_small_vmem and post >= 256 and tpost == post:
            tpost = _round_up(_cdiv(post, 2), 128)

    n_r = _cdiv(r_total, tr)
    grid = (_cdiv(pre, tp), _cdiv(post, tpost), n_r)   # reduction axis innermost

    if n_r == 1:
        kernel = functools.partial(_mean_oneshot_kernel, inv_r=inv_r,
                                   reduce_axis=1, keepdims=False)
        scratch = []
    else:
        kernel = functools.partial(_mean_acc_kernel, inv_r=inv_r, reduce_axis=1,
                                   keepdims=False, r_total=r_total, tr=tr,
                                   mask_needed=(r_total % tr != 0), r_grid_axis=2)
        scratch = [pltpu.VMEM((tp, tpost), jnp.float32)]

    return pl.pallas_call(
        kernel,
        out_shape=jax.ShapeDtypeStruct((pre, post), x3.dtype),
        grid_spec=pltpu.PrefetchScalarGridSpec(
            num_scalar_prefetch=0,
            grid=grid,
            in_specs=[pl.BlockSpec((tp, tr, tpost), lambda i, j, r: (i, r, j))],
            out_specs=pl.BlockSpec((tp, tpost), lambda i, j, r: (i, j)),
            scratch_shapes=scratch,
        ),
        compiler_params=pltpu.CompilerParams(
            dimension_semantics=("parallel", "parallel", "arbitrary"),
            vmem_limit_bytes=vmem_limit,
        ),
    )(x3)


def _mean_reduce_last(x2, pre, r_total, sub, elem_budget, vmem_limit, inv_r):
    """Mean over the last axis of a (pre, R) view (lane reduction). Returns (pre, 1)."""
    min_tp = pre if pre <= sub else sub
    if r_total * min_tp <= elem_budget:
        tr = r_total                              # full lane axis (any size is legal)
    else:
        tr = max(128, (elem_budget // min_tp) // 128 * 128)
        tr = min(tr, r_total)

    if pre <= sub:
        tp = pre                                  # full dim
    else:
        tp = max(sub, (elem_budget // max(tr, 1)) // sub * sub)
        tp = min(tp, _round_up(pre, sub))
        if _cdiv(pre, tp) < 2:                    # >= 2 row tiles for v7x megacore
            tp = _round_up(_cdiv(pre, 2), sub)

    n_r = _cdiv(r_total, tr)
    grid = (_cdiv(pre, tp), n_r)

    if n_r == 1:
        kernel = functools.partial(_mean_oneshot_kernel, inv_r=inv_r,
                                   reduce_axis=1, keepdims=True)
        scratch = []
    else:
        kernel = functools.partial(_mean_acc_kernel, inv_r=inv_r, reduce_axis=1,
                                   keepdims=True, r_total=r_total, tr=tr,
                                   mask_needed=(r_total % tr != 0), r_grid_axis=1)
        scratch = [pltpu.VMEM((tp, 1), jnp.float32)]

    return pl.pallas_call(
        kernel,
        out_shape=jax.ShapeDtypeStruct((pre, 1), x2.dtype),
        grid_spec=pltpu.PrefetchScalarGridSpec(
            num_scalar_prefetch=0,
            grid=grid,
            in_specs=[pl.BlockSpec((tp, tr), lambda i, r: (i, r))],
            out_specs=pl.BlockSpec((tp, 1), lambda i, r: (i, 0)),
            scratch_shapes=scratch,
        ),
        compiler_params=pltpu.CompilerParams(
            dimension_semantics=("parallel", "arbitrary"),
            vmem_limit_bytes=vmem_limit,
        ),
    )(x2)


# ------------------------------------------------------------------------- public API


@functools.partial(jax.jit, static_argnames=("dim", "keepdim", "_block_elems"))
def mean_pallas(x, dim, keepdim=False, _block_elems=None):
    """Pallas TPU implementation of x.mean(dim=dim, keepdim=keepdim) for a single int dim."""
    ndim = x.ndim
    dim = dim % ndim
    shape = x.shape

    pre = math.prod(shape[:dim]) if dim > 0 else 1
    r_total = shape[dim]
    post = math.prod(shape[dim + 1:]) if dim + 1 < ndim else 1

    itemsize = jnp.dtype(x.dtype).itemsize
    sub = _sublane_multiple(x.dtype)
    elem_budget, vmem_limit, is_small_vmem = _chip_budget(itemsize, _block_elems)
    inv_r = 1.0 / float(r_total)

    if post > 1:
        out = _mean_reduce_mid(x.reshape(pre, r_total, post), pre, r_total, post,
                               sub, elem_budget, vmem_limit, is_small_vmem, inv_r)
    else:
        out = _mean_reduce_last(x.reshape(pre, r_total), pre, r_total,
                                sub, elem_budget, vmem_limit, inv_r)

    if keepdim:
        out_shape = shape[:dim] + (1,) + shape[dim + 1:]
    else:
        out_shape = shape[:dim] + shape[dim + 1:]
    return out.reshape(out_shape)


class Mean:
    """Mirror of the PyTorch Mean module."""

    def __init__(self, dim, keepdim=False):
        self.dim = dim
        self.keepdim = keepdim

    def __call__(self, x):
        return mean_pallas(x, dim=self.dim, keepdim=self.keepdim)


if __name__ == "__main__":
    key = jax.random.PRNGKey(0)
    B, S, D = 2, 8, 128  # small, lane-dense token layout
    x = jax.random.normal(key, (B, S, D), dtype=jnp.float32)

    # Typical use of this block: mean-pool over the sequence axis.
    module = Mean(dim=1, keepdim=False)
    out = jax.block_until_ready(module(x))
    ref = jnp.mean(x, axis=1)
    assert out.shape == ref.shape
    assert jnp.allclose(out, ref, atol=1e-5, rtol=1e-5), "mismatch vs reference (dim=1)"

    # keepdim=True goes through the same kernel; only the wrapper reshape differs.
    out_kd = jax.block_until_ready(mean_pallas(x, dim=1, keepdim=True))
    assert out_kd.shape == (B, 1, D)
    assert jnp.allclose(out_kd[:, 0, :], ref, atol=1e-5, rtol=1e-5), "mismatch (keepdim)"

    # Leading axis.
    out0 = jax.block_until_ready(mean_pallas(x, dim=0))
    assert jnp.allclose(out0, jnp.mean(x, axis=0), atol=1e-5, rtol=1e-5), "mismatch (dim=0)"

    # Trailing axis exercises the dedicated lane-reduction (post == 1) path.
    out2 = jax.block_until_ready(mean_pallas(x, dim=2))
    assert jnp.allclose(out2, jnp.mean(x, axis=2), atol=1e-5, rtol=1e-5), "mismatch (dim=2)"

    # Ragged / multi-R-tile accumulator + in-kernel masking paths (tiny forced block budget
    # so the small test shapes still hit the multi-tile code; no HBM padding anywhere).
    k2 = jax.random.PRNGKey(0)
    y = jax.random.normal(k2, (2, 100, 40), dtype=jnp.float32)
    out_r = jax.block_until_ready(mean_pallas(y, dim=1, _block_elems=1024))
    assert jnp.allclose(out_r, jnp.mean(y, axis=1), atol=1e-5, rtol=1e-5), "mismatch (ragged 3D)"

    z = jax.random.normal(k2, (3, 300), dtype=jnp.float32)
    out_z = jax.block_until_ready(mean_pallas(z, dim=1, _block_elems=512))
    assert jnp.allclose(out_z, jnp.mean(z, axis=1), atol=1e-5, rtol=1e-5), "mismatch (ragged 2D)"

    print("KERNEL_OK")
</pallas_src>

<mosaic_0001>
module attributes {stable_mosaic.version = 11 : i64} {
  func.func @_mean_oneshot_kernel(%arg0: i32, %arg1: i32, %arg2: i32, %arg3: memref<2x8x128xf32, #tpu.memory_space<vmem>>, %arg4: memref<2x128xf32, #tpu.memory_space<vmem>>) attributes {dimension_semantics = [#tpu.dimension_semantics<parallel>, #tpu.dimension_semantics<parallel>, #tpu.dimension_semantics<arbitrary>], iteration_bounds = array<i64: 1, 1, 1>, scalar_prefetch = 0 : i64, scratch_operands = 0 : i64, tpu.core_type = #tpu.core_type<tc>, window_params = [{transform_indices = @transform_0, window_bounds = array<i64: 2, 8, 128>}, {transform_indices = @transform_1, window_bounds = array<i64: 2, 128>}]} {
    %c0 = arith.constant 0 : index
    %c0_0 = arith.constant 0 : index
    %c0_1 = arith.constant 0 : index
    %0 = vector.load %arg3[%c0, %c0_0, %c0_1] : memref<2x8x128xf32, #tpu.memory_space<vmem>>, vector<2x8x128xf32>
    %cst = arith.constant dense<0.000000e+00> : vector<2x128xf32>
    %1 = vector.multi_reduction <add>, %0, %cst [1] : vector<2x8x128xf32> to vector<2x128xf32>
    %cst_2 = arith.constant 1.250000e-01 : f32
    %2 = vector.broadcast %cst_2 : f32 to vector<2x128xf32>
    %3 = arith.mulf %1, %2 : vector<2x128xf32>
    %c0_3 = arith.constant 0 : index
    %c0_4 = arith.constant 0 : index
    %4 = vector.load %arg4[%c0_3, %c0_4] : memref<2x128xf32, #tpu.memory_space<vmem>>, vector<2x128xf32>
    tpu.vector_store %arg4[%c0_3, %c0_4], %3 {strides = array<i32>} : memref<2x128xf32, #tpu.memory_space<vmem>>, vector<2x128xf32>,
    return
  }
  func.func @transform_0(%arg0: i32, %arg1: i32, %arg2: i32) -> (i32, i32, i32) {
    %c0_i32 = arith.constant 0 : i32
    return %arg0, %arg2, %arg1 : i32, i32, i32
  }
  func.func @transform_1(%arg0: i32, %arg1: i32, %arg2: i32) -> (i32, i32) {
    %c0_i32 = arith.constant 0 : i32
    return %arg0, %arg1 : i32, i32
  }
}

</mosaic_0001>

<llo_original>
// kernel: mean_pallas.1
$region0: #{mean_pallas.1}
  #allocation0 [shape = 'u32[]', space=smem, size = 0x4, offset = 0x4, fixed_abs, tag = 'smem constant byte address 0x4 - core index']
  #allocation1 [shape = 'u32[144,128]{1,0:T(1,128)}', space=vmem, size = 0x12000, scoped, tag = 'internal scratch']
  %s0 = inlined_call_operand.hbm [shape: f32[2,8,128], index: 0, kind: input, shape index: {}]
  %s1 = inlined_call_operand.hbm [shape: f32[2,128], index: 1, kind: output, shape index: {}]
  %s2 = sld [smem:[#allocation0]]
  $region18: #{mean_pallas.1} parent=0
    _
  %s4 = ssub.s32 1, %s2
  %s5 = scalar_select 0, %s4, %s2
  $region1: #{mean_pallas.1} parent=0
    #allocation2 [shape = 'u8[8192]{0}', space=vmem, size = 0x2000, scoped, tag = 'input window, operand 0, single buffered']
    #allocation3 [shape = 's32[1]{0}', space=sflag, size = 0x4, scoped, tag = 'scoped memory for mean_pallas.1']
    #allocation4 [shape = 's32[1]{0}', space=sflag, size = 0x4, scoped, tag = 'scoped memory for mean_pallas.1']
    #allocation5 [shape = 'u8[1024]{0}', space=vmem, size = 0x400, scoped, tag = 'output window, operand 0, single buffered']
    %6 = vsyncpa [#allocation3], 0
    %7 = vsyncpa [#allocation4], 0
    // Predicated region
    $region2: #{mean_pallas.1} parent=1 // pred_check
      _
    $region3: #{mean_pallas.1} parent=1 // pred_check_branch
      %9 = sbr.rel (0) target = $region5
    $region4: #{mean_pallas.1} parent=1 // pred_region
      %s11 = ssub.s32 256, 256
      %12 = vsyncadd [#allocation3], %s11
      %s13 = sshll.u32 [#allocation2], 4
      %s14 = int_to_ptr.vmem [resolvable:$true] %s13
      %19 = dma.hbm_to_vmem [thread:$0]  %s0, 256, %s14, [#allocation3], 128, 128, 8
    $region5: #{mean_pallas.1} parent=1 // pred_fallthru
      _
    // Predicated region
    $region6: #{mean_pallas.1} parent=1 // pred_check
      _
    $region7: #{mean_pallas.1} parent=1 // pred_check_branch
      %21 = sbr.rel (0) target = $region9
    $region8: #{mean_pallas.1} parent=1 // pred_region
      %22 = dma.done [#allocation3], 256
    $region9: #{mean_pallas.1} parent=1 // pred_fallthru
      _
    %v23 = vld [vmem:[#allocation2] sm:$0xff]
    %v24 = vld [vmem:[#allocation2 + $0x8] sm:$0xff]
    %v25 = vrot.slane %v23, 4
    %v26 = vadd.f32 %v23, %v25
    %v27 = vrot.slane %v26, 2
    %v28 = vadd.f32 %v26, %v27
    %v29 = vrot.slane %v28, 1
    %v30 = vadd.f32 %v28, %v29
    %v31 = vrot.slane %v24, 4
    %v32 = vadd.f32 %v24, %v31
    %v33 = vrot.slane %v32, 2
    %v34 = vadd.f32 %v32, %v33
    %v35 = vrot.slane %v34, 1
    %v36 = vadd.f32 %v34, %v35
    %v37 = vmul.f32 %v30, 0.125
    %v38 = vmul.f32 %v36, 0.125
    %vm41 = vcmask 1041409
    %v42 = vsel %vm41, %v38, %v37
    %44 = vst [vmem:[#allocation5] sm:$0x3] %v42
    // Predicated region
    $region10: #{mean_pallas.1} parent=1 // pred_check
      _
    $region11: #{mean_pallas.1} parent=1 // pred_check_branch
      %46 = sbr.rel (0) target = $region13
    $region12: #{mean_pallas.1} parent=1 // pred_region
      %s48 = ssub.s32 32, 32
      %49 = vsyncadd [#allocation4], %s48
      %s51 = sshll.u32 [#allocation5], 4
      %s52 = int_to_ptr.vmem [resolvable:$true] %s51
      %54 = dma.vmem_to_hbm [thread:$0]  %s52, 32, %s1, [#allocation4]
    $region13: #{mean_pallas.1} parent=1 // pred_fallthru
      _
    // Predicated region
    $region14: #{mean_pallas.1} parent=1 // pred_check
      _
    $region15: #{mean_pallas.1} parent=1 // pred_check_branch
      %56 = sbr.rel (0) target = $region17
    $region16: #{mean_pallas.1} parent=1 // pred_region
      %57 = dma.done [#allocation4], 32
    $region17: #{mean_pallas.1} parent=1 // pred_fallthru
      _
    %58 = vsyncpa [#allocation3], 1
    %59 = vsyncpa [#allocation4], 1

</llo_original>
